<compile_context>
chip_gen: v7x
topology: tpu7x:2x2x1
jax: 0.10.0
libtpu: 0.0.40
codegen_flags: <defaults>
</compile_context>

<pallas_src>
import numpy as np
import jax
import jax.numpy as jnp
from jax.experimental import pallas as pl
from jax.experimental.pallas import tpu as pltpu


# ----------------------------------------------------------------------------
# Interpolation-matrix construction (matches torch F.interpolate bilinear,
# align_corners=False, including the negative-source clamp).
# ----------------------------------------------------------------------------
def _bilinear_matrix_np(out_size: int, in_size: int) -> np.ndarray:
    scale = in_size / out_size
    dst = np.arange(out_size, dtype=np.float64)
    src = (dst + 0.5) * scale - 0.5
    src = np.where(src < 0.0, 0.0, src)
    i0 = np.floor(src).astype(np.int64)
    i0 = np.minimum(i0, in_size - 1)
    i1 = np.minimum(i0 + 1, in_size - 1)
    w1 = src - i0
    w0 = 1.0 - w1
    A = np.zeros((out_size, in_size), dtype=np.float64)
    A[np.arange(out_size), i0] += w0
    A[np.arange(out_size), i1] += w1
    return A


def _kron_resize_matrix(H1, W1, H2, W2, dtype) -> jnp.ndarray:
    """Kt (H1*W1, H2*W2) so that x1_flat @ Kt == bilinear-resized x1 (flat)."""
    A_h = _bilinear_matrix_np(H2, H1)          # (H2, H1)
    A_w = _bilinear_matrix_np(W2, W1)          # (W2, W1)
    K = np.kron(A_h, A_w)                      # (H2*W2, H1*W1)
    return jnp.asarray(K.T, dtype=dtype)       # pre-transposed -> (S1, S2)


# ----------------------------------------------------------------------------
# Kernels
# ----------------------------------------------------------------------------
def _resize_concat_kernel(kt_ref, x1_ref, x2_ref, o_ref):
    # kt_ref: (S1, S2)   x1_ref: (bblk, C1, S1)
    # x2_ref: (bblk, C2, S2)   o_ref: (bblk, C1+C2, S2)
    bblk, c1, s1 = x1_ref.shape
    s2 = kt_ref.shape[1]
    # Single batched matmul: M = bblk*C1 rows on the MXU (one push/drain).
    lhs = x1_ref[...].reshape(bblk * c1, s1)
    y = jnp.dot(lhs, kt_ref[...], preferred_element_type=jnp.float32)
    y = y.reshape(bblk, c1, s2)
    # One full-block store (no split sublane-masked read-modify-write stores).
    o_ref[...] = jnp.concatenate(
        [y.astype(o_ref.dtype), x2_ref[...].astype(o_ref.dtype)], axis=1)


def _concat_kernel(x1_ref, x2_ref, o_ref):
    # No-resize branch: pure lane-dense channel concat, one full-block store.
    o_ref[...] = jnp.concatenate(
        [x1_ref[...].astype(o_ref.dtype), x2_ref[...].astype(o_ref.dtype)],
        axis=1)


# ----------------------------------------------------------------------------
# VMEM sizing helpers
# ----------------------------------------------------------------------------
def _vmem_capacity_bytes() -> int:
    try:
        return int(pltpu.get_tpu_info().vmem_capacity_bytes)
    except Exception:
        return 64 << 20  # conservative default: v7x per-TensorCore VMEM


def _ceil_to(a: int, m: int) -> int:
    return -(-a // m) * m


def _tile_bytes(shape, itemsize: int) -> int:
    """VMEM footprint of one block, including (8, 128) tile padding."""
    if len(shape) == 1:
        return _ceil_to(shape[0], 128) * itemsize
    *lead, sl, ln = shape
    n = 1
    for d in lead:
        n *= int(d)
    return n * _ceil_to(sl, 8) * _ceil_to(ln, 128) * itemsize


# ----------------------------------------------------------------------------
# Wrapper
# ----------------------------------------------------------------------------
def secret_embedder(x1: jnp.ndarray, x2: jnp.ndarray,
                    concat_channels: int = 6) -> jnp.ndarray:
    """Pallas implementation of SecretEmbedder.forward (NCHW)."""
    B, C1, H1, W1 = x1.shape
    B2, C2, H2, W2 = x2.shape
    assert B == B2, "batch dims must match"
    if C1 + C2 != concat_channels:
        raise ValueError(f"Expected {concat_channels} channels, but got {C1 + C2}")

    S1, S2 = H1 * W1, H2 * W2
    out_dtype = jnp.promote_types(x1.dtype, x2.dtype)   # torch.cat-style promotion
    need_resize = (H1, W1) != (H2, W2)

    # Matmul dtype: keep floating inputs as-is (bf16 stays bf16 -> MXU-native);
    # integer inputs are lifted to f32.
    mm_dtype = x1.dtype if jnp.issubdtype(x1.dtype, jnp.floating) else jnp.float32

    # Flatten spatial dims -> lane-dense last dimension.
    x1f = x1.reshape(B, C1, S1).astype(mm_dtype)
    x2f = x2.reshape(B, C2, S2)

    # --- VMEM accounting (Kt included, real dtype sizes, (8,128) padding) ---
    cap = _vmem_capacity_bytes()
    budget = cap // 2                       # ~32 MiB on v7x, ~64 MiB on v5e/v6e
    kt_bytes = (2 * _tile_bytes((S1, S2), jnp.dtype(mm_dtype).itemsize)
                if need_resize else 0)      # x2: BlockSpec double-buffers it
    per_batch = (_tile_bytes((C1, S1), jnp.dtype(mm_dtype).itemsize)
                 + _tile_bytes((C2, S2), jnp.dtype(x2f.dtype).itemsize)
                 + _tile_bytes((C1 + C2, S2), jnp.dtype(out_dtype).itemsize))

    # Keep >= 2 grid steps when B >= 2 (v7x has 2 TensorCores); otherwise pick
    # the largest batch block (divisor of B) that fits the VMEM budget.
    max_bblk = max(1, B // 2) if B >= 2 else 1
    bblk = 1
    for d in range(1, B + 1):
        if B % d == 0 and d <= max_bblk and kt_bytes + 2 * d * per_batch <= budget:
            bblk = d
    grid = (B // bblk,)

    needed = kt_bytes + 2 * bblk * per_batch
    vmem_limit = int(min(max(needed + (8 << 20), 32 << 20), cap * 3 // 4))
    cparams = pltpu.CompilerParams(
        dimension_semantics=("parallel",),
        vmem_limit_bytes=vmem_limit,
    )

    out_shape = jax.ShapeDtypeStruct((B, C1 + C2, S2), out_dtype)
    out_spec = pl.BlockSpec((bblk, C1 + C2, S2), lambda b: (b, 0, 0))

    if need_resize:
        kt = _kron_resize_matrix(H1, W1, H2, W2, mm_dtype)    # (S1, S2)
        out_flat = pl.pallas_call(
            _resize_concat_kernel,
            out_shape=out_shape,
            grid=grid,
            in_specs=[
                pl.BlockSpec((S1, S2), lambda b: (0, 0)),          # Kt (resident)
                pl.BlockSpec((bblk, C1, S1), lambda b: (b, 0, 0)),
                pl.BlockSpec((bblk, C2, S2), lambda b: (b, 0, 0)),
            ],
            out_specs=out_spec,
            compiler_params=cparams,
        )(kt, x1f, x2f)
    else:
        # Pure HBM-bandwidth copy; use the largest batch block that fits.
        out_flat = pl.pallas_call(
            _concat_kernel,
            out_shape=out_shape,
            grid=grid,
            in_specs=[
                pl.BlockSpec((bblk, C1, S1), lambda b: (b, 0, 0)),
                pl.BlockSpec((bblk, C2, S2), lambda b: (b, 0, 0)),
            ],
            out_specs=out_spec,
            compiler_params=cparams,
        )(x1f, x2f)

    return out_flat.reshape(B, C1 + C2, H2, W2)


# ----------------------------------------------------------------------------
# Pure-JAX reference (same interpolation math) for validation.
# ----------------------------------------------------------------------------
def _reference(x1, x2):
    _, _, H1, W1 = x1.shape
    _, _, H2, W2 = x2.shape
    out_dtype = jnp.promote_types(x1.dtype, x2.dtype)
    if (H1, W1) != (H2, W2):
        A_h = jnp.asarray(_bilinear_matrix_np(H2, H1), jnp.float32)
        A_w = jnp.asarray(_bilinear_matrix_np(W2, W1), jnp.float32)
        y = jnp.einsum('oh,bchw,pw->bcop', A_h, x1.astype(jnp.float32), A_w)
    else:
        y = x1
    return jnp.concatenate([y.astype(out_dtype), x2.astype(out_dtype)], axis=1)


if __name__ == "__main__":
    key = jax.random.PRNGKey(0)
    k1, k2, k3 = jax.random.split(key, 3)

    # Resize path: x1 (2,3,8,8) upsampled to x2's (16,16), concat to 6 channels.
    x1 = jax.random.normal(k1, (2, 3, 8, 8), dtype=jnp.float32)
    x2 = jax.random.normal(k2, (2, 3, 16, 16), dtype=jnp.float32)
    out = jax.block_until_ready(secret_embedder(x1, x2, concat_channels=6))
    ref = jax.block_until_ready(_reference(x1, x2))
    assert out.shape == (2, 6, 16, 16)
    assert jnp.allclose(out, ref, atol=1e-5, rtol=1e-5)

    # No-resize path: spatial sizes already match -> pure concat kernel.
    x1b = jax.random.normal(k3, (2, 3, 16, 16), dtype=jnp.float32)
    out_b = jax.block_until_ready(secret_embedder(x1b, x2, concat_channels=6))
    ref_b = jax.block_until_ready(_reference(x1b, x2))
    assert out_b.shape == (2, 6, 16, 16)
    assert jnp.allclose(out_b, ref_b, atol=1e-6, rtol=1e-6)

    print("KERNEL_OK")
</pallas_src>

<mosaic_0001>
module attributes {stable_mosaic.version = 11 : i64} {
  func.func @_resize_concat_kernel(%arg0: i32, %arg1: memref<64x256xf32, #tpu.memory_space<vmem>>, %arg2: memref<1x3x64xf32, #tpu.memory_space<vmem>>, %arg3: memref<1x3x256xf32, #tpu.memory_space<vmem>>, %arg4: memref<1x6x256xf32, #tpu.memory_space<vmem>>) attributes {dimension_semantics = [#tpu.dimension_semantics<parallel>], iteration_bounds = array<i64: 2>, scalar_prefetch = 0 : i64, scratch_operands = 0 : i64, tpu.core_type = #tpu.core_type<tc>, window_params = [{pipeline_mode = #tpu.pipeline_mode<synchronous>, transform_indices = @transform_0, window_bounds = array<i64: 64, 256>}, {transform_indices = @transform_1, window_bounds = array<i64: 1, 3, 64>}, {transform_indices = @transform_2, window_bounds = array<i64: 1, 3, 256>}, {transform_indices = @transform_3, window_bounds = array<i64: 1, 6, 256>}]} {
    %c0 = arith.constant 0 : index
    %c0_0 = arith.constant 0 : index
    %c0_1 = arith.constant 0 : index
    %0 = vector.load %arg2[%c0, %c0_0, %c0_1] : memref<1x3x64xf32, #tpu.memory_space<vmem>>, vector<1x3x64xf32>
    %1 = vector.shape_cast %0 : vector<1x3x64xf32> to vector<3x64xf32>
    %c0_2 = arith.constant 0 : index
    %c0_3 = arith.constant 0 : index
    %2 = vector.load %arg1[%c0_2, %c0_3] : memref<64x256xf32, #tpu.memory_space<vmem>>, vector<64x256xf32>
    %cst = arith.constant dense<0.000000e+00> : vector<3x256xf32>
    %3 = tpu.matmul %1, %2, %cst {dimension_numbers = #tpu.dot_dimension_numbers<[1], [0], [0], [1], [0, 0, 1, 1], [], []>} : vector<3x64xf32>, vector<64x256xf32>, vector<3x256xf32> -> vector<3x256xf32>
    %4 = vector.shape_cast %3 : vector<3x256xf32> to vector<1x3x256xf32>
    %c0_4 = arith.constant 0 : index
    %c0_5 = arith.constant 0 : index
    %c0_6 = arith.constant 0 : index
    %5 = vector.load %arg3[%c0_4, %c0_5, %c0_6] : memref<1x3x256xf32, #tpu.memory_space<vmem>>, vector<1x3x256xf32>
    %6 = tpu.concatenate %4, %5 in 1 : vector<1x3x256xf32>, vector<1x3x256xf32> -> vector<1x6x256xf32>
    %c0_7 = arith.constant 0 : index
    %c0_8 = arith.constant 0 : index
    %c0_9 = arith.constant 0 : index
    %7 = vector.load %arg4[%c0_7, %c0_8, %c0_9] : memref<1x6x256xf32, #tpu.memory_space<vmem>>, vector<1x6x256xf32>
    tpu.vector_store %arg4[%c0_7, %c0_8, %c0_9], %6 {strides = array<i32>} : memref<1x6x256xf32, #tpu.memory_space<vmem>>, vector<1x6x256xf32>,
    return
  }
  func.func @transform_0(%arg0: i32) -> (i32, i32) {
    %c0_i32 = arith.constant 0 : i32
    %c0_i32_0 = arith.constant 0 : i32
    %c0_i32_1 = arith.constant 0 : i32
    return %c0_i32, %c0_i32_0 : i32, i32
  }
  func.func @transform_1(%arg0: i32) -> (i32, i32, i32) {
    %c0_i32 = arith.constant 0 : i32
    %c0_i32_0 = arith.constant 0 : i32
    %c0_i32_1 = arith.constant 0 : i32
    return %arg0, %c0_i32, %c0_i32_0 : i32, i32, i32
  }
  func.func @transform_2(%arg0: i32) -> (i32, i32, i32) {
    %c0_i32 = arith.constant 0 : i32
    %c0_i32_0 = arith.constant 0 : i32
    %c0_i32_1 = arith.constant 0 : i32
    return %arg0, %c0_i32, %c0_i32_0 : i32, i32, i32
  }
  func.func @transform_3(%arg0: i32) -> (i32, i32, i32) {
    %c0_i32 = arith.constant 0 : i32
    %c0_i32_0 = arith.constant 0 : i32
    %c0_i32_1 = arith.constant 0 : i32
    return %arg0, %c0_i32, %c0_i32_0 : i32, i32, i32
  }
}

</mosaic_0001>

<llo_original>
// kernel: tpu_custom_call.1
$region0: #{tpu_custom_call.1}
  #allocation0 [shape = 'u32[]', space=smem, size = 0x4, offset = 0x4, fixed_abs, tag = 'smem constant byte address 0x4 - core index']
  #allocation1 [shape = 'u32[144,128]{1,0:T(1,128)}', space=vmem, size = 0x12000, scoped, tag = 'internal scratch']
  %s0 = inlined_call_operand.hbm [shape: f32[64,256], index: 0, kind: input, shape index: {}]
  %s1 = inlined_call_operand.vmem [shape: f32[2,3,64], index: 1, kind: input, shape index: {}]
  %s2 = inlined_call_operand.vmem [shape: f32[2,3,256], index: 2, kind: input, shape index: {}]
  %s3 = inlined_call_operand.vmem [shape: f32[2,6,256], index: 3, kind: output, shape index: {}]
  %s4 = sld [smem:[#allocation0]]
  $region49: #{tpu_custom_call.1} parent=0
    _
  %s6 = ssub.s32 1, %s4
  %s7 = scalar_select 0, %s6, %s4
  $region1: #{tpu_custom_call.1} parent=0
    #allocation2 [shape = 'u8[65536]{0}', space=vmem, size = 0x10000, scoped, tag = 'input window, operand 0, single buffered']
    #allocation3 [shape = 's32[2]{0}', space=sflag, size = 0x8, scoped, tag = 'scoped memory for tpu_custom_call.1']
    %8 = vsyncpa [#allocation3], 0
    loop: start=0, step=1, limit=4
    $region2: #{tpu_custom_call.1} parent=1 // loop_pre_header
      _
    $region3: #{tpu_custom_call.1} parent=1 // loop_header
      %s10 = sphi 0, %s14
      %p11 = scmp.ge.s32.totalorder %s10, 4
      %s18 = sphi 0, %s18
      %s20 = sphi 0, %s18
      %s21 = sphi 0, %s20
      %s35 = sphi 0, %s21
      %s41 = sphi 0, %s43
      %s44 = sphi 0, %s41
      %s45 = sphi 0, %s44
      %s61 = sphi 0, %s45
      %s67 = sphi 0, %s69
      %s70 = sphi 0, %s67
      %s71 = sphi 0, %s70
      %s87 = sphi 0, %s71
      %s93 = sphi 0, %s95
      %s96 = sphi 0, %s93
      %s97 = sphi 0, %s96
      %s113 = sphi 0, %s97
    $region4: #{tpu_custom_call.1} parent=1 // loop_header_branch
      %13 = sbr.rel (%p11) target = $region8
    $region5: #{tpu_custom_call.1} parent=1 // loop_body
      %s15 = ssub.s32 %s10, 1
      %s16 = ssub.s32 %s10, 2
      %s17 = sadd.s32 %s10, 1
      %s19 = sadd.s32 %s18, 1
      %p22 = scmp.eq.s32.totalorder %s10, 1
      %p23 = scmp.ne.s32.totalorder %s18, %s20
      %p24 = scmp.eq.s32.totalorder %s10, 0
      %p25 = por %p23, %p24
      %p26 = scmp.ne.s32.totalorder %s18, %s20
      %p27 = scmp.eq.s32.totalorder %s15, 1
      %p28 = por %p26, %p27
      %p29 = scmp.ne.s32.totalorder %s20, %s21
      %p30 = scmp.eq.s32.totalorder %s15, 0
      %p31 = por %p29, %p30
      %p32 = scmp.ne.s32.totalorder %s20, %s21
      %p33 = scmp.eq.s32.totalorder %s16, 1
      %p34 = por %p32, %p33
      %p36 = scmp.ne.s32.totalorder %s21, %s35
      %p37 = scmp.eq.s32.totalorder %s16, 0
      %p38 = por %p36, %p37
      %s39 = ssub.s32 %s10, %s17
      %p40 = scmp.eq.s32.totalorder %s39, 0
      %s42 = sadd.s32 %s41, 1
      %s43 = scalar_select %p40, %s41, %s42
      %p46 = pneg %p40
      %p47 = scmp.eq.s32.totalorder %s10, 1
      %p48 = por %p46, %p47
      %p49 = scmp.ne.s32.totalorder %s41, %s44
      %p50 = scmp.eq.s32.totalorder %s10, 0
      %p51 = por %p49, %p50
      %p52 = scmp.ne.s32.totalorder %s41, %s44
      %p53 = scmp.eq.s32.totalorder %s15, 1
      %p54 = por %p52, %p53
      %p55 = scmp.ne.s32.totalorder %s44, %s45
      %p56 = scmp.eq.s32.totalorder %s15, 0
      %p57 = por %p55, %p56
      %p58 = scmp.ne.s32.totalorder %s44, %s45
      %p59 = scmp.eq.s32.totalorder %s16, 1
      %p60 = por %p58, %p59
      %p62 = scmp.ne.s32.totalorder %s45, %s61
      %p63 = scmp.eq.s32.totalorder %s16, 0
      %p64 = por %p62, %p63
      %s65 = ssub.s32 %s10, %s17
      %p66 = scmp.eq.s32.totalorder %s65, 0
      %s68 = sadd.s32 %s67, 1
      %s69 = scalar_select %p66, %s67, %s68
      %p72 = pneg %p66
      %p73 = scmp.eq.s32.totalorder %s10, 1
      %p74 = por %p72, %p73
      %p75 = scmp.ne.s32.totalorder %s67, %s70
      %p76 = scmp.eq.s32.totalorder %s10, 0
      %p77 = por %p75, %p76
      %p78 = scmp.ne.s32.totalorder %s67, %s70
      %p79 = scmp.eq.s32.totalorder %s15, 1
      %p80 = por %p78, %p79
      %p81 = scmp.ne.s32.totalorder %s70, %s71
      %p82 = scmp.eq.s32.totalorder %s15, 0
      %p83 = por %p81, %p82
      %p84 = scmp.ne.s32.totalorder %s70, %s71
      %p85 = scmp.eq.s32.totalorder %s16, 1
      %p86 = por %p84, %p85
      %p88 = scmp.ne.s32.totalorder %s71, %s87
      %p89 = scmp.eq.s32.totalorder %s16, 0
      %p90 = por %p88, %p89
      %s91 = ssub.s32 %s10, %s17
      %p92 = scmp.eq.s32.totalorder %s91, 0
      %s94 = sadd.s32 %s93, 1
      %s95 = scalar_select %p92, %s93, %s94
      %p98 = pneg %p92
      %p99 = scmp.eq.s32.totalorder %s10, 1
      %p100 = por %p98, %p99
      %p101 = scmp.ne.s32.totalorder %s93, %s96
      %p102 = scmp.eq.s32.totalorder %s10, 0
      %p103 = por %p101, %p102
      %p104 = scmp.ne.s32.totalorder %s93, %s96
      %p105 = scmp.eq.s32.totalorder %s15, 1
      %p106 = por %p104, %p105
      %p107 = scmp.ne.s32.totalorder %s96, %s97
      %p108 = scmp.eq.s32.totalorder %s15, 0
      %p109 = por %p107, %p108
      %p110 = scmp.ne.s32.totalorder %s96, %s97
      %p111 = scmp.eq.s32.totalorder %s16, 1
      %p112 = por %p110, %p111
      %p114 = scmp.ne.s32.totalorder %s97, %s113
      %p115 = scmp.eq.s32.totalorder %s16, 0
      %p116 = por %p114, %p115
      %p117 = scmp.le.s32.totalorder 1, %s10
      %p118 = scmp.lt.s32.totalorder %s10, 3
      %p119 = pnand %p117, %p118
      %p120 = pneg %p119
      // Predicated region
      $region9: #{tpu_custom_call.1} parent=5 // pred_check
        _
      $region10: #{tpu_custom_call.1} parent=5 // pred_check_branch
        %122 = sbr.rel (%p119) target = $region12
      $region11: #{tpu_custom_call.1} parent=5 // pred_region
        %s123 = ssub.s32 %s10, 1
        // Predicated region
        $region13: #{tpu_custom_call.1} parent=11 // pred_check
          %p124 = pneg %p31
        $region14: #{tpu_custom_call.1} parent=11 // pred_check_branch
          %126 = sbr.rel (%p124) target = $region16
        $region15: #{tpu_custom_call.1} parent=11 // pred_region
          %s128 = ssub.s32 2048, 2048
          %129 = vsyncadd [#allocation3], %s128
          %s130 = sshll.u32 [#allocation2], 4
          %s131 = int_to_ptr.vmem [resolvable:$true] %s130
          %136 = dma.hbm_to_vmem [thread:$0]  %s0, 2048, %s131, [#allocation3], 256, 256, 16
        $region16: #{tpu_custom_call.1} parent=11 // pred_fallthru
          _
      $region12: #{tpu_custom_call.1} parent=5 // pred_fallthru
        _
      %p137 = scmp.lt.s32.totalorder %s10, 2
      // Predicated region
      $region17: #{tpu_custom_call.1} parent=5 // pred_check
        %p138 = pneg %p137
      $region18: #{tpu_custom_call.1} parent=5 // pred_check_branch
        %140 = sbr.rel (%p138) target = $region20
      $region19: #{tpu_custom_call.1} parent=5 // pred_region
        // Predicated region
        $region21: #{tpu_custom_call.1} parent=19 // pred_check
          %p141 = pneg %p51
        $region22: #{tpu_custom_call.1} parent=19 // pred_check_branch
          %143 = sbr.rel (%p141) target = $region24
        $region23: #{tpu_custom_call.1} parent=19 // pred_region
          %p144 = scmp.lt.s32.totalorder %s10, 1
          %s145 = scalar_select %p144, %s10, 1
          %s146 = smul.addr %s145, 4
          %s147 = scalar_lea.vmem %s1, %s146
        $region24: #{tpu_custom_call.1} parent=19 // pred_fallthru
          _
        // Predicated region
        $region25: #{tpu_custom_call.1} parent=19 // pred_check
          %p148 = pneg %p77
        $region26: #{tpu_custom_call.1} parent=19 // pred_check_branch
          %150 = sbr.rel (%p148) target = $region28
        $region27: #{tpu_custom_call.1} parent=19 // pred_region
          %p151 = scmp.lt.s32.totalorder %s10, 1
          %s152 = scalar_select %p151, %s10, 1
          %s153 = smul.addr %s152, 2
          %s154 = smul.addr %s153, 4
          %s155 = scalar_lea.vmem %s2, %s154
        $region28: #{tpu_custom_call.1} parent=19 // pred_fallthru
          _
      $region20: #{tpu_custom_call.1} parent=5 // pred_fallthru
        _
      %p156 = scmp.le.s32.totalorder 1, %s10
      %p157 = scmp.lt.s32.totalorder %s10, 3
      %p158 = pnand %p156, %p157
      %p159 = pneg %p158
      // Predicated region
      $region29: #{tpu_custom_call.1} parent=5 // pred_check
        _
      $region30: #{tpu_custom_call.1} parent=5 // pred_check_branch
        %161 = sbr.rel (%p158) target = $region32
      $region31: #{tpu_custom_call.1} parent=5 // pred_region
        %s162 = ssub.s32 %s10, 1
        // Predicated region
        $region33: #{tpu_custom_call.1} parent=31 // pred_check
          %p163 = pneg %p31
        $region34: #{tpu_custom_call.1} parent=31 // pred_check_branch
          %165 = sbr.rel (%p163) target = $region36
        $region35: #{tpu_custom_call.1} parent=31 // pred_region
          %166 = dma.done [#allocation3], 2048
        $region36: #{tpu_custom_call.1} parent=31 // pred_fallthru
          _
        %p167 = pneg %p31
        %p168 = pneg %p28
        %p169 = scmp.lt.s32.totalorder %s15, 1
        %s170 = scalar_select %p169, %s15, 1
        %s171 = smul.addr %s170, 4
        %s172 = scalar_lea.vmem %s1, %s171
        %p173 = pneg %p57
        %p174 = pneg %p54
        %p175 = scmp.lt.s32.totalorder %s15, 1
        %s176 = scalar_select %p175, %s15, 1
        %s177 = smul.addr %s176, 2
        %s178 = smul.addr %s177, 4
        %s179 = scalar_lea.vmem %s2, %s178
        %p180 = pneg %p83
        %p181 = pneg %p80
        %p182 = pneg %p109
        %p183 = pneg %p106
        %p184 = scmp.lt.s32.totalorder %s15, 1
        %s185 = scalar_select %p184, %s15, 1
        %s186 = smul.addr %s185, 2
        %s187 = smul.addr %s186, 8
        %s188 = scalar_lea.vmem %s3, %s187
        %p189 = scmp.lt.s32.totalorder %s15, 1
        %s190 = scalar_select %p189, %s15, 1
        %s191 = smul.addr %s190, 4
        %s192 = scalar_lea.vmem %s1, %s191
        %p193 = scmp.lt.s32.totalorder %s15, 1
        %s194 = scalar_select %p193, %s15, 1
        %s195 = smul.addr %s194, 2
        %s196 = smul.addr %s195, 4
        %s197 = scalar_lea.vmem %s2, %s196
        %p198 = scmp.lt.s32.totalorder %s15, 1
        %s199 = scalar_select %p198, %s15, 1
        %s200 = smul.addr %s199, 2
        %s201 = smul.addr %s200, 8
        %s202 = scalar_lea.vmem %s3, %s201
        %v203 = vld [vmem:[%s192] sm:$0x7]
        %v204 = vld [vmem:[#allocation2] sm:$0xff]
        %v205 = vld [vmem:[#allocation2 + $0x8] sm:$0xff]
        %v206 = vld [vmem:[#allocation2 + $0x10] sm:$0xff]
        %v207 = vld [vmem:[#allocation2 + $0x18] sm:$0xff]
        %v208 = vld [vmem:[#allocation2 + $0x20] sm:$0xff]
        %v209 = vld [vmem:[#allocation2 + $0x28] sm:$0xff]
        %v210 = vld [vmem:[#allocation2 + $0x30] sm:$0xff]
        %v211 = vld [vmem:[#allocation2 + $0x38] sm:$0xff]
        %v212 = vld [vmem:[#allocation2 + $0x40] sm:$0xff]
        %v213 = vld [vmem:[#allocation2 + $0x48] sm:$0xff]
        %v214 = vld [vmem:[#allocation2 + $0x50] sm:$0xff]
        %v215 = vld [vmem:[#allocation2 + $0x58] sm:$0xff]
        %v216 = vld [vmem:[#allocation2 + $0x60] sm:$0xff]
        %v217 = vld [vmem:[#allocation2 + $0x68] sm:$0xff]
        %v218 = vld [vmem:[#allocation2 + $0x70] sm:$0xff]
        %v219 = vld [vmem:[#allocation2 + $0x78] sm:$0xff]
        %vm220 = vcmask 523264
        %v222 = vsel %vm220, %v203, 0
        %224 = vmatprep.subr.mxu0 %v205
        %225 = vmatpush1.msra.mxu0 %v204
        %226 = vmatprep.subr.mxu0 %v207
        %227 = vmatpush1.msra.mxu0 %v206
        %228 = vmatprep.subr.mxu0 %v209
        %229 = vmatpush1.msra.mxu0 %v208
        %230 = vmatprep.subr.mxu0 %v211
        %231 = vmatpush1.msra.mxu0 %v210
        %232 = vmatprep.subr.mxu0 %v213
        %233 = vmatpush1.msra.mxu0 %v212
        %234 = vmatprep.subr.mxu0 %v215
        %235 = vmatpush1.msra.mxu0 %v214
        %236 = vmatprep.subr.mxu0 %v217
        %237 = vmatpush1.msra.mxu0 %v216
        %238 = vmatprep.subr.mxu0 %v219
        %239 = vmatpush1.msra.mxu0 %v218
        %240 = vmatprep.subr.mxu0 0.0
        %241 = vmatpush1.msra.mxu0 0.0
        %242 = vmatprep.subr.mxu0 0.0
        %243 = vmatpush1.msra.mxu0 0.0
        %244 = vmatprep.subr.mxu0 0.0
        %245 = vmatpush1.msra.mxu0 0.0
        %246 = vmatprep.subr.mxu0 0.0
        %247 = vmatpush1.msra.mxu0 0.0
        %248 = vmatprep.subr.mxu0 0.0
        %249 = vmatpush1.msra.mxu0 0.0
        %250 = vmatprep.subr.mxu0 0.0
        %251 = vmatpush1.msra.mxu0 0.0
        %252 = vmatprep.subr.mxu0 0.0
        %253 = vmatpush1.msra.mxu0 0.0
        %254 = vmatprep.subr.mxu0 0.0
        %255 = vmatpush1.msra.mxu0 0.0
        %256 = vmatprep.subr.mxu0 0.0
        %257 = vmatpush1.msra.mxu0 0.0
        %258 = vmatprep.subr.mxu0 0.0
        %259 = vmatpush1.msra.mxu0 0.0
        %260 = vmatprep.subr.mxu0 0.0
        %261 = vmatpush1.msra.mxu0 0.0
        %262 = vmatprep.subr.mxu0 0.0
        %263 = vmatpush1.msra.mxu0 0.0
        %264 = vmatprep.subr.mxu0 0.0
        %265 = vmatpush1.msra.mxu0 0.0
        %266 = vmatprep.subr.mxu0 0.0
        %267 = vmatpush1.msra.mxu0 0.0
        %268 = vmatprep.subr.mxu0 0.0
        %269 = vmatpush1.msra.mxu0 0.0
        %270 = vmatprep.subr.mxu0 0.0
        %271 = vmatpush1.msra.mxu0 0.0
        %272 = vmatprep.subr.mxu0 0.0
        %273 = vmatpush1.msra.mxu0 0.0
        %274 = vmatprep.subr.mxu0 0.0
        %275 = vmatpush1.msra.mxu0 0.0
        %276 = vmatprep.subr.mxu0 0.0
        %277 = vmatpush1.msra.mxu0 0.0
        %278 = vmatprep.subr.mxu0 0.0
        %279 = vmatpush1.msra.mxu0 0.0
        %280 = vmatprep.subr.mxu0 0.0
        %281 = vmatpush1.msra.mxu0 0.0
        %282 = vmatprep.subr.mxu0 0.0
        %283 = vmatpush1.msra.mxu0 0.0
        %284 = vmatprep.subr.mxu0 0.0
        %285 = vmatpush1.msra.mxu0 0.0
        %286 = vmatprep.subr.mxu0 0.0
        %287 = vmatpush1.msra.mxu0 0.0
        %288 = vmatprep.mubr.f32.mxu0 0.0
        %289 = vmatmul.mubr.f32.gmra.mrb[0].mxu0 %v222
        %v290 = vpop.f32.mrb[0].mxu0
        %v291 = vadd.f32 0.0, %v290
        %v292 = vpop.f32.mrb[0].mxu0
        %v293 = vadd.f32 0.0, %v292
        %294 = vdwg.mxu0
        %v295 = vld [vmem:[%s197] sm:$0x77]
        %v297 = vcombine.high %v295, %v295
        %v298 = vrot.slane %v295, 5
        %v299 = vrot.slane %v297, 5
        %vm302 = vcmask 1042432
        %v303 = vsel %vm302, %v291, %v298
        %v304 = vsel %vm302, %v293, %v299
        %305 = vst [vmem:[%s202] sm:$0x3f] %v303
        %306 = vst [vmem:[%s202 + $0x8] sm:$0x3f] %v304
        %p307 = scmp.lt.s32.totalorder %s15, 1
        %s308 = scalar_select %p307, %s15, 1
        %s309 = smul.addr %s308, 2
        %s310 = smul.addr %s309, 8
        %s311 = scalar_lea.vmem %s3, %s310
        // Predicated region
        $region37: #{tpu_custom_call.1} parent=31 // pred_check
          %p312 = pneg %p106
        $region38: #{tpu_custom_call.1} parent=31 // pred_check_branch
          %314 = sbr.rel (%p312) target = $region40
        $region39: #{tpu_custom_call.1} parent=31 // pred_region
          _
        $region40: #{tpu_custom_call.1} parent=31 // pred_fallthru
          _
      $region32: #{tpu_custom_call.1} parent=5 // pred_fallthru
        _
      %p315 = scmp.le.s32.totalorder 2, %s10
      // Predicated region
      $region41: #{tpu_custom_call.1} parent=5 // pred_check
        %p316 = pneg %p315
      $region42: #{tpu_custom_call.1} parent=5 // pred_check_branch
        %318 = sbr.rel (%p316) target = $region44
      $region43: #{tpu_custom_call.1} parent=5 // pred_region
        %s319 = ssub.s32 %s10, 2
        // Predicated region
        $region45: #{tpu_custom_call.1} parent=43 // pred_check
          %p320 = pneg %p112
        $region46: #{tpu_custom_call.1} parent=43 // pred_check_branch
          %322 = sbr.rel (%p320) target = $region48
        $region47: #{tpu_custom_call.1} parent=43 // pred_region
          %p323 = scmp.lt.s32.totalorder %s16, 1
          %s324 = scalar_select %p323, %s16, 1
          %s325 = smul.addr %s324, 2
          %s326 = smul.addr %s325, 8
          %s327 = scalar_lea.vmem %s3, %s326
        $region48: #{tpu_custom_call.1} parent=43 // pred_fallthru
          _
      $region44: #{tpu_custom_call.1} parent=5 // pred_fallthru
        _
    $region6: #{tpu_custom_call.1} parent=1 // loop_footer
      %s14 = sadd.s32 1, %s10
    $region7: #{tpu_custom_call.1} parent=1 // loop_footer_branch
      %9 = sbr.rel target = $region3
    $region8: #{tpu_custom_call.1} parent=1 // loop_exit
      _
    %328 = vsyncpa [#allocation3], 1
    %s329 = scalar_lea.sflag [#allocation3], 1
    %330 = vsyncpa %s329, 1

</llo_original>
